<compile_context>
chip_gen: v7x
topology: tpu7x:2x2x1
jax: 0.10.0
libtpu: 0.0.40
codegen_flags: <defaults>
</compile_context>

<pallas_src>
import jax
import jax.numpy as jnp
from jax.experimental import pallas as pl
from jax.experimental.pallas import tpu as pltpu


def _layernorm(x, w, b, eps=1e-5):
    mu = jnp.mean(x, axis=-1, keepdims=True)
    var = jnp.mean(jnp.square(x - mu), axis=-1, keepdims=True)
    return (x - mu) * jax.lax.rsqrt(var + eps) * w + b


# --------------------------------------------------------------------------
# Pass 1: LayerNorm + fused QKV projection + residual view-mean
# --------------------------------------------------------------------------
def qkv_kernel(x_ref, ln1w_ref, ln1b_ref, wqkv_ref, bqkv_ref,
               q_ref, k_ref, v_ref, xmean_ref):
    V, TS, H = x_ref.shape
    d = q_ref.shape[-1]

    x = x_ref[...]                                    # (V, TS, H) f32
    xmean_ref[...] = jnp.mean(x, axis=0)              # residual term (TS, H)

    # LayerNorm statistics in f32.
    y = _layernorm(x, ln1w_ref[...], ln1b_ref[...])   # (V, TS, H)

    # Fused q|k|v projection: collapse views into M, bf16 operands, f32 accum.
    # The 1/sqrt(d) attention scale is already folded into the q columns.
    y2 = y.reshape(V * TS, H).astype(jnp.bfloat16)
    qkv = jnp.dot(y2, wqkv_ref[...],
                  preferred_element_type=jnp.float32) + bqkv_ref[...]  # (V*TS, 3d)

    q = qkv[:, 0:d].reshape(V, TS, d)
    k = qkv[:, d:2 * d].reshape(V, TS, d)
    v = qkv[:, 2 * d:3 * d].reshape(V, TS, d)

    q_ref[...] = q.astype(jnp.bfloat16)
    k_ref[...] = k.astype(jnp.bfloat16)
    v_ref[...] = v.astype(jnp.bfloat16)


# --------------------------------------------------------------------------
# Pass 2: attention + output projection + residual + final LayerNorm
# --------------------------------------------------------------------------
def attn_kernel(q_ref, k_ref, v_ref, sim_ref, xmean_ref,
                wo_ref, bo_ref, ln2w_ref, ln2b_ref, out_ref):
    f32, bf16 = jnp.float32, jnp.bfloat16

    # Scores per view (scale already folded into q).  NT batched contraction
    # (same form as the documented flash-attention kernel).
    s = jnp.einsum('vqd,vkd->vqk', q_ref[...], k_ref[...],
                   preferred_element_type=f32)                  # (V, TS, S)

    # Softmax over keys in f32; divide moved to the EUP (approx reciprocal).
    m = jnp.max(s, axis=-1, keepdims=True)
    e = jnp.exp(s - m)
    p = e * pl.reciprocal(jnp.sum(e, axis=-1, keepdims=True), approx=True)

    # Reference order: bias is added AFTER softmax (rows no longer sum to 1).
    p = p + sim_ref[...]
    # TODO(synk): weights_dropout treated as identity (eval / inference mode).

    ctx = jnp.einsum('vqk,vkd->vqd', p.astype(bf16), v_ref[...],
                     preferred_element_type=f32)                # (V, TS, d)

    # Output projection.  The reference's transpose+view concat over views is
    # sum_v ctx[v] @ Wo[v]; expressed here as a batched matmul + view-sum to
    # stay within Mosaic-supported dot_general forms.
    proj = jnp.einsum('vqd,vdh->vqh', ctx.astype(bf16), wo_ref[...],
                      preferred_element_type=f32)               # (V, TS, H)
    mvsa = jnp.sum(proj, axis=0) + bo_ref[...]                  # (TS, H)

    out = xmean_ref[...] + mvsa
    out_ref[...] = _layernorm(out, ln2w_ref[...], ln2b_ref[...])


# --------------------------------------------------------------------------
# Host wrapper
# --------------------------------------------------------------------------
def _pick_block(S, target=128):
    """Query-tile size: multiples of 128 when possible, else the full axis."""
    if S % target == 0:
        return target
    return S


def extraction_forward(sim, x, params):
    """sim: (V, S, S), x: (V, S, H) -> (S, H) float32."""
    (ln1w, ln1b, wq, bq, wk, bk, wv, bv, wo, bo, ln2w, ln2b) = params
    V, S, H = x.shape
    d = H // V
    scale = float(d) ** -0.5
    f32, bf16 = jnp.float32, jnp.bfloat16

    x = x.astype(f32)
    sim = sim.astype(f32)

    # Fold 1/sqrt(d) into the q projection and fuse q|k|v into one (H, 3d) matmul.
    wqkv = jnp.concatenate([wq * scale, wk, wv], axis=1).astype(bf16)   # (H, 3d)
    bqkv = jnp.concatenate([bq * scale, bk, bv], axis=1).astype(f32)    # (1, 3d)
    wo3 = wo.reshape(V, d, H).astype(bf16)                              # (V, d, H)

    ts = _pick_block(S)
    grid = (S // ts,)
    parallel = pltpu.CompilerParams(dimension_semantics=("parallel",))

    # ---- Pass 1: LayerNorm + fused QKV + residual view-mean ----------------
    q, k, v, xmean = pl.pallas_call(
        qkv_kernel,
        grid=grid,
        in_specs=[
            pl.BlockSpec((V, ts, H), lambda i: (0, i, 0)),   # x tile
            pl.BlockSpec((1, H), lambda i: (0, 0)),          # ln1 weight
            pl.BlockSpec((1, H), lambda i: (0, 0)),          # ln1 bias
            pl.BlockSpec((H, 3 * d), lambda i: (0, 0)),      # fused Wq|Wk|Wv
            pl.BlockSpec((1, 3 * d), lambda i: (0, 0)),      # fused bq|bk|bv
        ],
        out_specs=[
            pl.BlockSpec((V, ts, d), lambda i: (0, i, 0)),   # q  (bf16)
            pl.BlockSpec((V, ts, d), lambda i: (0, i, 0)),   # k  (bf16)
            pl.BlockSpec((V, ts, d), lambda i: (0, i, 0)),   # v  (bf16)
            pl.BlockSpec((ts, H), lambda i: (i, 0)),         # mean_v(x) (f32)
        ],
        out_shape=[
            jax.ShapeDtypeStruct((V, S, d), bf16),
            jax.ShapeDtypeStruct((V, S, d), bf16),
            jax.ShapeDtypeStruct((V, S, d), bf16),
            jax.ShapeDtypeStruct((S, H), f32),
        ],
        compiler_params=parallel,
    )(x, ln1w, ln1b, wqkv, bqkv)

    # ---- Pass 2: attention + projection + residual + final LN --------------
    out = pl.pallas_call(
        attn_kernel,
        grid=grid,
        in_specs=[
            pl.BlockSpec((V, ts, d), lambda i: (0, i, 0)),   # q tile
            pl.BlockSpec((V, S, d), lambda i: (0, 0, 0)),    # k, full resident
            pl.BlockSpec((V, S, d), lambda i: (0, 0, 0)),    # v, full resident
            pl.BlockSpec((V, ts, S), lambda i: (0, i, 0)),   # sim tile
            pl.BlockSpec((ts, H), lambda i: (i, 0)),         # residual mean tile
            pl.BlockSpec((V, d, H), lambda i: (0, 0, 0)),    # Wo as (V, d, H)
            pl.BlockSpec((1, H), lambda i: (0, 0)),          # bo
            pl.BlockSpec((1, H), lambda i: (0, 0)),          # ln2 weight
            pl.BlockSpec((1, H), lambda i: (0, 0)),          # ln2 bias
        ],
        out_specs=pl.BlockSpec((ts, H), lambda i: (i, 0)),
        out_shape=jax.ShapeDtypeStruct((S, H), f32),
        compiler_params=parallel,
    )(q, k, v, sim, xmean, wo3, bo, ln2w, ln2b)
    return out


# --------------------------------------------------------------------------
# Params + pure-JAX reference
# --------------------------------------------------------------------------
def init_params(key, hidden_dim, view_size):
    d = hidden_dim // view_size
    ks = jax.random.split(key, 12)
    s = 0.02
    ln1w = 1.0 + 0.05 * jax.random.normal(ks[8], (1, hidden_dim), jnp.float32)
    ln1b = 0.05 * jax.random.normal(ks[9], (1, hidden_dim), jnp.float32)
    wq = jax.random.normal(ks[0], (hidden_dim, d), jnp.float32) * s
    bq = jax.random.normal(ks[1], (1, d), jnp.float32) * s
    wk = jax.random.normal(ks[2], (hidden_dim, d), jnp.float32) * s
    bk = jax.random.normal(ks[3], (1, d), jnp.float32) * s
    wv = jax.random.normal(ks[4], (hidden_dim, d), jnp.float32) * s
    bv = jax.random.normal(ks[5], (1, d), jnp.float32) * s
    wo = jax.random.normal(ks[6], (view_size * d, hidden_dim), jnp.float32) * s
    bo = jax.random.normal(ks[7], (1, hidden_dim), jnp.float32) * s
    ln2w = 1.0 + 0.05 * jax.random.normal(ks[10], (1, hidden_dim), jnp.float32)
    ln2b = 0.05 * jax.random.normal(ks[11], (1, hidden_dim), jnp.float32)
    return (ln1w, ln1b, wq, bq, wk, bk, wv, bv, wo, bo, ln2w, ln2b)


def extraction_reference(sim, x, params, mm_dtype=jnp.float32):
    """Pure-JAX reference.  mm_dtype=bfloat16 mirrors the kernel's precision
    policy (bf16 matmul operands, f32 accumulation); float32 is the exact
    PyTorch-equivalent math."""
    (ln1w, ln1b, wq, bq, wk, bk, wv, bv, wo, bo, ln2w, ln2b) = params
    x = x.astype(jnp.float32)
    sim = sim.astype(jnp.float32)
    V, S, H = x.shape
    d = H // V
    scale = float(d) ** -0.5
    f32 = jnp.float32

    def mm(eq, a, b):
        return jnp.einsum(eq, a.astype(mm_dtype), b.astype(mm_dtype),
                          preferred_element_type=f32)

    y = _layernorm(x, ln1w, ln1b)
    q = mm('vsh,hd->vsd', y, wq * scale) + bq * scale
    k = mm('vsh,hd->vsd', y, wk) + bk
    v = mm('vsh,hd->vsd', y, wv) + bv
    s = mm('vsd,vtd->vst', q, k)
    p = jax.nn.softmax(s, axis=-1) + sim
    ctx = mm('vst,vtd->vsd', p, v)
    cat = jnp.transpose(ctx, (1, 0, 2)).reshape(S, V * d)
    mvsa = mm('sc,ch->sh', cat, wo) + bo
    out = jnp.mean(x, axis=0) + mvsa
    return _layernorm(out, ln2w, ln2b)


if __name__ == "__main__":
    hidden_dim = 32
    view_size = 4
    seq_len = 8

    key = jax.random.PRNGKey(0)
    kx, ks, kp = jax.random.split(key, 3)

    x = jax.random.normal(kx, (view_size, seq_len, hidden_dim), jnp.float32)
    sim = jax.random.normal(ks, (view_size, seq_len, seq_len), jnp.float32) * 0.1
    params = init_params(kp, hidden_dim, view_size)

    out = jax.block_until_ready(extraction_forward(sim, x, params))
    assert out.shape == (seq_len, hidden_dim)

    # Tight check vs a precision-matched (bf16 matmul / f32 accum) reference,
    # loose check vs the exact f32 reference (semantic fidelity).
    ref_bf16 = extraction_reference(sim, x, params, mm_dtype=jnp.bfloat16)
    ref_f32 = extraction_reference(sim, x, params, mm_dtype=jnp.float32)
    err_bf16 = float(jnp.max(jnp.abs(out - ref_bf16)))
    err_f32 = float(jnp.max(jnp.abs(out - ref_f32)))
    assert jnp.allclose(out, ref_bf16, atol=2e-3, rtol=2e-3), (
        f"mismatch vs precision-matched reference (max abs err {err_bf16})")
    assert jnp.allclose(out, ref_f32, atol=3e-2, rtol=3e-2), (
        f"mismatch vs float32 reference (max abs err {err_f32})")

    print("KERNEL_OK")
</pallas_src>

<mosaic_0001>
module attributes {stable_mosaic.version = 11 : i64} {
  func.func @qkv_kernel(%arg0: i32, %arg1: memref<4x8x32xf32, #tpu.memory_space<vmem>>, %arg2: memref<1x32xf32, #tpu.memory_space<vmem>>, %arg3: memref<1x32xf32, #tpu.memory_space<vmem>>, %arg4: memref<32x24xbf16, #tpu.memory_space<vmem>>, %arg5: memref<1x24xf32, #tpu.memory_space<vmem>>, %arg6: memref<4x8x8xbf16, #tpu.memory_space<vmem>>, %arg7: memref<4x8x8xbf16, #tpu.memory_space<vmem>>, %arg8: memref<4x8x8xbf16, #tpu.memory_space<vmem>>, %arg9: memref<8x32xf32, #tpu.memory_space<vmem>>) attributes {dimension_semantics = [#tpu.dimension_semantics<parallel>], iteration_bounds = array<i64: 1>, scalar_prefetch = 0 : i64, scratch_operands = 0 : i64, tpu.core_type = #tpu.core_type<tc>, window_params = [{transform_indices = @transform_0, window_bounds = array<i64: 4, 8, 32>}, {pipeline_mode = #tpu.pipeline_mode<synchronous>, transform_indices = @transform_1, window_bounds = array<i64: 1, 32>}, {pipeline_mode = #tpu.pipeline_mode<synchronous>, transform_indices = @transform_2, window_bounds = array<i64: 1, 32>}, {pipeline_mode = #tpu.pipeline_mode<synchronous>, transform_indices = @transform_3, window_bounds = array<i64: 32, 24>}, {pipeline_mode = #tpu.pipeline_mode<synchronous>, transform_indices = @transform_4, window_bounds = array<i64: 1, 24>}, {transform_indices = @transform_5, window_bounds = array<i64: 4, 8, 8>}, {transform_indices = @transform_6, window_bounds = array<i64: 4, 8, 8>}, {transform_indices = @transform_7, window_bounds = array<i64: 4, 8, 8>}, {transform_indices = @transform_8, window_bounds = array<i64: 8, 32>}]} {
    %c0 = arith.constant 0 : index
    %c0_0 = arith.constant 0 : index
    %c0_1 = arith.constant 0 : index
    %0 = vector.load %arg1[%c0, %c0_0, %c0_1] : memref<4x8x32xf32, #tpu.memory_space<vmem>>, vector<4x8x32xf32>
    %cst = arith.constant dense<0.000000e+00> : vector<8x32xf32>
    %1 = vector.multi_reduction <add>, %0, %cst [0] : vector<4x8x32xf32> to vector<8x32xf32>
    %cst_2 = arith.constant 4.000000e+00 : f32
    %2 = vector.broadcast %cst_2 : f32 to vector<8x32xf32>
    %3 = arith.divf %1, %2 : vector<8x32xf32>
    %c0_3 = arith.constant 0 : index
    %c0_4 = arith.constant 0 : index
    %4 = vector.load %arg9[%c0_3, %c0_4] : memref<8x32xf32, #tpu.memory_space<vmem>>, vector<8x32xf32>
    tpu.vector_store %arg9[%c0_3, %c0_4], %3 {strides = array<i32>} : memref<8x32xf32, #tpu.memory_space<vmem>>, vector<8x32xf32>,
    %c0_5 = arith.constant 0 : index
    %c0_6 = arith.constant 0 : index
    %5 = vector.load %arg2[%c0_5, %c0_6] : memref<1x32xf32, #tpu.memory_space<vmem>>, vector<1x32xf32>
    %c0_7 = arith.constant 0 : index
    %c0_8 = arith.constant 0 : index
    %6 = vector.load %arg3[%c0_7, %c0_8] : memref<1x32xf32, #tpu.memory_space<vmem>>, vector<1x32xf32>
    %cst_9 = arith.constant dense<0.000000e+00> : vector<4x8xf32>
    %7 = vector.multi_reduction <add>, %0, %cst_9 [2] : vector<4x8x32xf32> to vector<4x8xf32>
    %8 = vector.shape_cast %7 : vector<4x8xf32> to vector<4x8x1xf32>
    %cst_10 = arith.constant 3.200000e+01 : f32
    %9 = vector.broadcast %cst_10 : f32 to vector<4x8x1xf32>
    %10 = arith.divf %8, %9 : vector<4x8x1xf32>
    %11 = vector.broadcast %10 : vector<4x8x1xf32> to vector<4x8x32xf32>
    %12 = arith.subf %0, %11 : vector<4x8x32xf32>
    %13 = arith.mulf %12, %12 : vector<4x8x32xf32>
    %cst_11 = arith.constant dense<0.000000e+00> : vector<4x8xf32>
    %14 = vector.multi_reduction <add>, %13, %cst_11 [2] : vector<4x8x32xf32> to vector<4x8xf32>
    %15 = vector.shape_cast %14 : vector<4x8xf32> to vector<4x8x1xf32>
    %cst_12 = arith.constant 3.200000e+01 : f32
    %16 = vector.broadcast %cst_12 : f32 to vector<4x8x1xf32>
    %17 = arith.divf %15, %16 : vector<4x8x1xf32>
    %18 = vector.broadcast %10 : vector<4x8x1xf32> to vector<4x8x32xf32>
    %19 = arith.subf %0, %18 : vector<4x8x32xf32>
    %cst_13 = arith.constant 9.99999974E-6 : f32
    %20 = vector.broadcast %cst_13 : f32 to vector<4x8x1xf32>
    %21 = arith.addf %17, %20 : vector<4x8x1xf32>
    %22 = math.rsqrt %21 : vector<4x8x1xf32>
    %23 = vector.broadcast %22 : vector<4x8x1xf32> to vector<4x8x32xf32>
    %24 = arith.mulf %19, %23 : vector<4x8x32xf32>
    %25 = vector.shape_cast %5 : vector<1x32xf32> to vector<1x1x32xf32>
    %26 = vector.broadcast %25 : vector<1x1x32xf32> to vector<4x8x32xf32>
    %27 = arith.mulf %24, %26 : vector<4x8x32xf32>
    %28 = vector.shape_cast %6 : vector<1x32xf32> to vector<1x1x32xf32>
    %29 = vector.broadcast %28 : vector<1x1x32xf32> to vector<4x8x32xf32>
    %30 = arith.addf %27, %29 : vector<4x8x32xf32>
    %31 = vector.shape_cast %30 : vector<4x8x32xf32> to vector<32x32xf32>
    %32 = arith.truncf %31 : vector<32x32xf32> to vector<32x32xbf16>
    %c0_14 = arith.constant 0 : index
    %c0_15 = arith.constant 0 : index
    %33 = vector.load %arg4[%c0_14, %c0_15] : memref<32x24xbf16, #tpu.memory_space<vmem>>, vector<32x24xbf16>
    %cst_16 = arith.constant dense<0.000000e+00> : vector<32x24xf32>
    %34 = tpu.matmul %32, %33, %cst_16 {dimension_numbers = #tpu.dot_dimension_numbers<[1], [0], [0], [1], [0, 0, 1, 1], [], []>} : vector<32x32xbf16>, vector<32x24xbf16>, vector<32x24xf32> -> vector<32x24xf32>
    %c0_17 = arith.constant 0 : index
    %c0_18 = arith.constant 0 : index
    %35 = vector.load %arg5[%c0_17, %c0_18] : memref<1x24xf32, #tpu.memory_space<vmem>>, vector<1x24xf32>
    %36 = vector.broadcast %35 : vector<1x24xf32> to vector<32x24xf32>
    %37 = arith.addf %34, %36 : vector<32x24xf32>
    %38 = vector.extract_strided_slice %37 {offsets = [0, 0], sizes = [32, 8], strides = [1, 1]} : vector<32x24xf32> to vector<32x8xf32>
    %39 = vector.shape_cast %38 : vector<32x8xf32> to vector<4x8x8xf32>
    %40 = vector.extract_strided_slice %37 {offsets = [0, 8], sizes = [32, 8], strides = [1, 1]} : vector<32x24xf32> to vector<32x8xf32>
    %41 = vector.shape_cast %40 : vector<32x8xf32> to vector<4x8x8xf32>
    %42 = vector.extract_strided_slice %37 {offsets = [0, 16], sizes = [32, 8], strides = [1, 1]} : vector<32x24xf32> to vector<32x8xf32>
    %43 = vector.shape_cast %42 : vector<32x8xf32> to vector<4x8x8xf32>
    %44 = arith.truncf %39 : vector<4x8x8xf32> to vector<4x8x8xbf16>
    %c0_19 = arith.constant 0 : index
    %c0_20 = arith.constant 0 : index
    %c0_21 = arith.constant 0 : index
    %45 = vector.load %arg6[%c0_19, %c0_20, %c0_21] : memref<4x8x8xbf16, #tpu.memory_space<vmem>>, vector<4x8x8xbf16>
    tpu.vector_store %arg6[%c0_19, %c0_20, %c0_21], %44 {strides = array<i32>} : memref<4x8x8xbf16, #tpu.memory_space<vmem>>, vector<4x8x8xbf16>,
    %46 = arith.truncf %41 : vector<4x8x8xf32> to vector<4x8x8xbf16>
    %c0_22 = arith.constant 0 : index
    %c0_23 = arith.constant 0 : index
    %c0_24 = arith.constant 0 : index
    %47 = vector.load %arg7[%c0_22, %c0_23, %c0_24] : memref<4x8x8xbf16, #tpu.memory_space<vmem>>, vector<4x8x8xbf16>
    tpu.vector_store %arg7[%c0_22, %c0_23, %c0_24], %46 {strides = array<i32>} : memref<4x8x8xbf16, #tpu.memory_space<vmem>>, vector<4x8x8xbf16>,
    %48 = arith.truncf %43 : vector<4x8x8xf32> to vector<4x8x8xbf16>
    %c0_25 = arith.constant 0 : index
    %c0_26 = arith.constant 0 : index
    %c0_27 = arith.constant 0 : index
    %49 = vector.load %arg8[%c0_25, %c0_26, %c0_27] : memref<4x8x8xbf16, #tpu.memory_space<vmem>>, vector<4x8x8xbf16>
    tpu.vector_store %arg8[%c0_25, %c0_26, %c0_27], %48 {strides = array<i32>} : memref<4x8x8xbf16, #tpu.memory_space<vmem>>, vector<4x8x8xbf16>,
    return
  }
  func.func @transform_0(%arg0: i32) -> (i32, i32, i32) {
    %c0_i32 = arith.constant 0 : i32
    %c0_i32_0 = arith.constant 0 : i32
    %c0_i32_1 = arith.constant 0 : i32
    return %c0_i32, %arg0, %c0_i32_0 : i32, i32, i32
  }
  func.func @transform_1(%arg0: i32) -> (i32, i32) {
    %c0_i32 = arith.constant 0 : i32
    %c0_i32_0 = arith.constant 0 : i32
    %c0_i32_1 = arith.constant 0 : i32
    return %c0_i32, %c0_i32_0 : i32, i32
  }
  func.func @transform_2(%arg0: i32) -> (i32, i32) {
    %c0_i32 = arith.constant 0 : i32
    %c0_i32_0 = arith.constant 0 : i32
    %c0_i32_1 = arith.constant 0 : i32
    return %c0_i32, %c0_i32_0 : i32, i32
  }
  func.func @transform_3(%arg0: i32) -> (i32, i32) {
    %c0_i32 = arith.constant 0 : i32
    %c0_i32_0 = arith.constant 0 : i32
    %c0_i32_1 = arith.constant 0 : i32
    return %c0_i32, %c0_i32_0 : i32, i32
  }
  func.func @transform_4(%arg0: i32) -> (i32, i32) {
    %c0_i32 = arith.constant 0 : i32
    %c0_i32_0 = arith.constant 0 : i32
    %c0_i32_1 = arith.constant 0 : i32
    return %c0_i32, %c0_i32_0 : i32, i32
  }
  func.func @transform_5(%arg0: i32) -> (i32, i32, i32) {
    %c0_i32 = arith.constant 0 : i32
    %c0_i32_0 = arith.constant 0 : i32
    %c0_i32_1 = arith.constant 0 : i32
    return %c0_i32, %arg0, %c0_i32_0 : i32, i32, i32
  }
  func.func @transform_6(%arg0: i32) -> (i32, i32, i32) {
    %c0_i32 = arith.constant 0 : i32
    %c0_i32_0 = arith.constant 0 : i32
    %c0_i32_1 = arith.constant 0 : i32
    return %c0_i32, %arg0, %c0_i32_0 : i32, i32, i32
  }
  func.func @transform_7(%arg0: i32) -> (i32, i32, i32) {
    %c0_i32 = arith.constant 0 : i32
    %c0_i32_0 = arith.constant 0 : i32
    %c0_i32_1 = arith.constant 0 : i32
    return %c0_i32, %arg0, %c0_i32_0 : i32, i32, i32
  }
  func.func @transform_8(%arg0: i32) -> (i32, i32) {
    %c0_i32 = arith.constant 0 : i32
    %c0_i32_0 = arith.constant 0 : i32
    return %arg0, %c0_i32 : i32, i32
  }
}

</mosaic_0001>

<llo_original>
// kernel: tpu_custom_call.1
$region0: #{tpu_custom_call.1}
  #allocation0 [shape = 'u32[]', space=smem, size = 0x4, offset = 0x4, fixed_abs, tag = 'smem constant byte address 0x4 - core index']
  #allocation1 [shape = 'u32[144,128]{1,0:T(1,128)}', space=vmem, size = 0x12000, scoped, tag = 'internal scratch']
  %s0 = inlined_call_operand.hbm [shape: f32[4,8,32], index: 0, kind: input, shape index: {}]
  %s1 = inlined_call_operand.vmem [shape: f32[1,32], index: 1, kind: input, shape index: {}]
  %s2 = inlined_call_operand.vmem [shape: f32[1,32], index: 2, kind: input, shape index: {}]
  %s3 = inlined_call_operand.vmem [shape: bf16[32,24], index: 3, kind: input, shape index: {}]
  %s4 = inlined_call_operand.vmem [shape: f32[1,24], index: 4, kind: input, shape index: {}]
  %s5 = inlined_call_operand.hbm [shape: bf16[4,8,8], index: 5, kind: output, shape index: {0}]
  %s6 = inlined_call_operand.hbm [shape: bf16[4,8,8], index: 6, kind: output, shape index: {1}]
  %s7 = inlined_call_operand.hbm [shape: bf16[4,8,8], index: 7, kind: output, shape index: {2}]
  %s8 = inlined_call_operand.hbm [shape: f32[8,32], index: 8, kind: output, shape index: {3}]
  %9 = xla_tuple %s5, %s6, %s7, %s8
  %s10 = sld [smem:[#allocation0]]
  $region58: #{tpu_custom_call.1} parent=0
    _
  %s12 = ssub.s32 1, %s10
  %s13 = scalar_select 0, %s12, %s10
  $region1: #{tpu_custom_call.1} parent=0
    #allocation2 [shape = 'u8[16384]{0}', space=vmem, size = 0x4000, scoped, tag = 'input window, operand 0, single buffered']
    #allocation3 [shape = 's32[1]{0}', space=sflag, size = 0x4, scoped, tag = 'scoped memory for tpu_custom_call.1']
    #allocation4 [shape = 's32[1]{0}', space=sflag, size = 0x4, scoped, tag = 'scoped memory for tpu_custom_call.1']
    #allocation5 [shape = 'u8[8192]{0}', space=vmem, size = 0x2000, scoped, tag = 'output window, operand 0, single buffered']
    #allocation6 [shape = 'u8[8192]{0}', space=vmem, size = 0x2000, scoped, tag = 'output window, operand 1, single buffered']
    #allocation7 [shape = 's32[1]{0}', space=sflag, size = 0x4, scoped, tag = 'scoped memory for tpu_custom_call.1']
    #allocation8 [shape = 'u8[8192]{0}', space=vmem, size = 0x2000, scoped, tag = 'output window, operand 2, single buffered']
    #allocation9 [shape = 'u8[4096]{0}', space=vmem, size = 0x1000, scoped, tag = 'output window, operand 3, single buffered']
    #allocation10 [shape = 's32[1]{0}', space=sflag, size = 0x4, scoped, tag = 'scoped memory for tpu_custom_call.1']
    %14 = vsyncpa [#allocation3], 0
    %15 = vsyncpa [#allocation4], 0
    %16 = vsyncpa [#allocation7], 0
    %17 = vsyncpa [#allocation10], 0
    // Predicated region
    $region2: #{tpu_custom_call.1} parent=1 // pred_check
      _
    $region3: #{tpu_custom_call.1} parent=1 // pred_check_branch
      %19 = sbr.rel (0) target = $region5
    $region4: #{tpu_custom_call.1} parent=1 // pred_region
      %s21 = ssub.s32 512, 512
      %22 = vsyncadd [#allocation3], %s21
      %s23 = sshll.u32 [#allocation2], 4
      %s24 = int_to_ptr.vmem [resolvable:$true] %s23
      %29 = dma.hbm_to_vmem [thread:$0]  %s0, 512, %s24, [#allocation3], 128, 128, 8
    $region5: #{tpu_custom_call.1} parent=1 // pred_fallthru
      _
    // Predicated region
    $region6: #{tpu_custom_call.1} parent=1 // pred_check
      _
    $region7: #{tpu_custom_call.1} parent=1 // pred_check_branch
      %31 = sbr.rel (0) target = $region9
    $region8: #{tpu_custom_call.1} parent=1 // pred_region
      _
    $region9: #{tpu_custom_call.1} parent=1 // pred_fallthru
      _
    // Predicated region
    $region10: #{tpu_custom_call.1} parent=1 // pred_check
      _
    $region11: #{tpu_custom_call.1} parent=1 // pred_check_branch
      %33 = sbr.rel (0) target = $region13
    $region12: #{tpu_custom_call.1} parent=1 // pred_region
      _
    $region13: #{tpu_custom_call.1} parent=1 // pred_fallthru
      _
    // Predicated region
    $region14: #{tpu_custom_call.1} parent=1 // pred_check
      _
    $region15: #{tpu_custom_call.1} parent=1 // pred_check_branch
      %35 = sbr.rel (0) target = $region17
    $region16: #{tpu_custom_call.1} parent=1 // pred_region
      _
    $region17: #{tpu_custom_call.1} parent=1 // pred_fallthru
      _
    // Predicated region
    $region18: #{tpu_custom_call.1} parent=1 // pred_check
      _
    $region19: #{tpu_custom_call.1} parent=1 // pred_check_branch
      %37 = sbr.rel (0) target = $region21
    $region20: #{tpu_custom_call.1} parent=1 // pred_region
      _
    $region21: #{tpu_custom_call.1} parent=1 // pred_fallthru
      _
    // Predicated region
    $region22: #{tpu_custom_call.1} parent=1 // pred_check
      _
    $region23: #{tpu_custom_call.1} parent=1 // pred_check_branch
      %39 = sbr.rel (0) target = $region25
    $region24: #{tpu_custom_call.1} parent=1 // pred_region
      %40 = dma.done [#allocation3], 512
    $region25: #{tpu_custom_call.1} parent=1 // pred_fallthru
      _
    %v42 = vld [vmem:[#allocation2] sm:$0xff]
    %v43 = vld [vmem:[#allocation2 + $0x8] sm:$0xff]
    %v44 = vld [vmem:[#allocation2 + $0x10] sm:$0xff]
    %v45 = vld [vmem:[#allocation2 + $0x18] sm:$0xff]
    %vm46 = vcmask 261120
    %v47 = vsel %vm46, %v42, 0.0
    %v48 = vsel %vm46, %v43, 0.0
    %v49 = vadd.f32 %v47, %v48
    %v50 = vsel %vm46, %v44, 0.0
    %v51 = vadd.f32 %v49, %v50
    %v52 = vsel %vm46, %v45, 0.0
    %v53 = vadd.f32 %v51, %v52
    %v54 = vrcp.pop 4.0
    %v55 = vmul.f32 %v53, %v54
    %56 = vst.msk [vmem:[#allocation9] sm:$0xff] %vm46, %v55
    %v57 = vld [vmem:[%s1] sm:$0x1]
    %v58 = vld [vmem:[%s2] sm:$0x1]
    %59 = vadd.xlane.f32.xlu0 %v47
    %v60 = vpop.xlane.xlu0 %59
    %61 = vadd.xlane.f32.xlu0 %v48
    %v62 = vpop.xlane.xlu0 %61
    %63 = vadd.xlane.f32.xlu0 %v50
    %v64 = vpop.xlane.xlu0 %63
    %65 = vadd.xlane.f32.xlu0 %v52
    %v66 = vpop.xlane.xlu0 %65
    %v67 = vrcp.pop 32.0
    %v68 = vmul.f32 %v60, %v67
    %v69 = vmul.f32 %v62, %v67
    %v70 = vmul.f32 %v64, %v67
    %v71 = vmul.f32 %v66, %v67
    %v72 = vsub.f32 %v42, %v68
    %v73 = vsub.f32 %v43, %v69
    %v74 = vsub.f32 %v44, %v70
    %v75 = vsub.f32 %v45, %v71
    %v76 = vmul.f32 %v72, %v72
    %v77 = vmul.f32 %v73, %v73
    %v78 = vmul.f32 %v74, %v74
    %v79 = vmul.f32 %v75, %v75
    %v80 = vsel %vm46, %v76, 0.0
    %81 = vadd.xlane.f32.xlu0 %v80
    %v82 = vpop.xlane.xlu0 %81
    %v83 = vsel %vm46, %v77, 0.0
    %84 = vadd.xlane.f32.xlu0 %v83
    %v85 = vpop.xlane.xlu0 %84
    %v86 = vsel %vm46, %v78, 0.0
    %87 = vadd.xlane.f32.xlu0 %v86
    %v88 = vpop.xlane.xlu0 %87
    %v89 = vsel %vm46, %v79, 0.0
    %90 = vadd.xlane.f32.xlu0 %v89
    %v91 = vpop.xlane.xlu0 %90
    %v92 = vmul.f32 %v82, %v67
    %v93 = vmul.f32 %v85, %v67
    %v94 = vmul.f32 %v88, %v67
    %v95 = vmul.f32 %v91, %v67
    %v96 = vadd.f32 %v92, 1e-05
    %v97 = vadd.f32 %v93, 1e-05
    %v98 = vadd.f32 %v94, 1e-05
    %v99 = vadd.f32 %v95, 1e-05
    %v100 = vrsqrt.pop %v96
    %v101 = vrsqrt.pop %v97
    %v102 = vrsqrt.pop %v98
    %v103 = vrsqrt.pop %v99
    %v104 = vmul.f32 %v72, %v100
    %v105 = vmul.f32 %v73, %v101
    %v106 = vmul.f32 %v74, %v102
    %v107 = vmul.f32 %v75, %v103
    %v109 = vlaneseq
    %v110 = vshrl.u32 %v109, 7
    %v111 = vsub.s32 0, %v110
    %v112 = vrot.slane %v57, %v111
    %v114 = vmul.f32 %v104, %v112
    %v115 = vmul.f32 %v105, %v112
    %v116 = vmul.f32 %v106, %v112
    %v117 = vmul.f32 %v107, %v112
    %v119 = vlaneseq
    %v120 = vshrl.u32 %v119, 7
    %v121 = vsub.s32 0, %v120
    %v122 = vrot.slane %v58, %v121
    %v124 = vadd.f32 %v114, %v122
    %v125 = vadd.f32 %v115, %v122
    %v126 = vadd.f32 %v116, %v122
    %v127 = vadd.f32 %v117, %v122
    %v128 = vpack.c.bf16 %v125, %v124
    %v129 = vpack.c.bf16 %v127, %v126
    %v130 = vld [vmem:[%s3] sm:$0xf]
    %v131 = vld [vmem:[%s3 + $0x4] sm:$0xf]
    %v132 = vld [vmem:[%s3 + $0x8] sm:$0xf]
    %v133 = vld [vmem:[%s3 + $0xc] sm:$0xf]
    %v134 = vld [vmem:[%s4] sm:$0x1]
    %v136 = vlaneseq
    %v137 = vshrl.u32 %v136, 7
    %v138 = vsub.s32 0, %v137
    %v139 = vrot.slane %v134, %v138
    %v145 = vunpack.c.l.b16 %v130
    %v146 = vunpack.c.l.b16 %v131
    %v147 = vunpack.c.l.b16 %v132
    %v148 = vunpack.c.l.b16 %v133
    %v149 = vpack.c.b16 %v146, %v145
    %v150 = vpack.c.b16 %v148, %v147
    %v154 = vsel %vm46, %v128, 0
    %v157 = vsel %vm46, %v129, 0
    %159 = vmatprep.subr.bf16.mxu0 0
    %160 = vmatpush1.bf16.msra.mxu0 %v149
    %161 = vmatprep.subr.bf16.mxu0 0
    %162 = vmatpush1.bf16.msra.mxu0 %v150
    %163 = vmatprep.subr.bf16.mxu0 0
    %164 = vmatpush1.bf16.msra.mxu0 0
    %165 = vmatprep.subr.bf16.mxu0 0
    %166 = vmatpush1.bf16.msra.mxu0 0
    %167 = vmatprep.subr.bf16.mxu0 0
    %168 = vmatpush1.bf16.msra.mxu0 0
    %169 = vmatprep.subr.bf16.mxu0 0
    %170 = vmatpush1.bf16.msra.mxu0 0
    %171 = vmatprep.subr.bf16.mxu0 0
    %172 = vmatpush1.bf16.msra.mxu0 0
    %173 = vmatprep.subr.bf16.mxu0 0
    %174 = vmatpush1.bf16.msra.mxu0 0
    %175 = vmatprep.subr.bf16.mxu0 0
    %176 = vmatpush1.bf16.msra.mxu0 0
    %177 = vmatprep.subr.bf16.mxu0 0
    %178 = vmatpush1.bf16.msra.mxu0 0
    %179 = vmatprep.subr.bf16.mxu0 0
    %180 = vmatpush1.bf16.msra.mxu0 0
    %181 = vmatprep.subr.bf16.mxu0 0
    %182 = vmatpush1.bf16.msra.mxu0 0
    %183 = vmatprep.subr.bf16.mxu0 0
    %184 = vmatpush1.bf16.msra.mxu0 0
    %185 = vmatprep.subr.bf16.mxu0 0
    %186 = vmatpush1.bf16.msra.mxu0 0
    %187 = vmatprep.subr.bf16.mxu0 0
    %188 = vmatpush1.bf16.msra.mxu0 0
    %189 = vmatprep.subr.bf16.mxu0 0
    %190 = vmatpush1.bf16.msra.mxu0 0
    %191 = vmatprep.mubr.bf16.mxu0 0
    %192 = vmatmul.mubr.bf16.gmra.mrb[0].mxu0 %v154
    %v193 = vpop.f32.mrb[0].mxu0
    %v194 = vadd.f32 %v139, %v193
    %v195 = vpop.f32.mrb[0].mxu0
    %v196 = vpop.f32.mrb[0].mxu0
    %v197 = vadd.f32 %v139, %v196
    %v198 = vpop.f32.mrb[0].mxu0
    %199 = vmatprep.mubr.bf16.mxu0 0
    %200 = vmatmul.mubr.bf16.gmra.mrb[0].mxu0 %v157
    %v201 = vpop.f32.mrb[0].mxu0
    %v202 = vadd.f32 %v139, %v201
    %v203 = vpop.f32.mrb[0].mxu0
    %v204 = vpop.f32.mrb[0].mxu0
    %v205 = vadd.f32 %v139, %v204
    %v206 = vpop.f32.mrb[0].mxu0
    %207 = vdwg.mxu0
    %v208 = vpack.c.bf16 %v194, %v194
    %v209 = vpack.c.bf16 %v197, %v197
    %v210 = vpack.c.bf16 %v202, %v202
    %v211 = vpack.c.bf16 %v205, %v205
    %vm212 = vcmask 60416
    %213 = vst.msk [vmem:[#allocation5] sm:$0xf] %vm212, %v208
    %214 = vst.msk [vmem:[#allocation5 + $0x4] sm:$0xf] %vm212, %v209
    %215 = vst.msk [vmem:[#allocation5 + $0x8] sm:$0xf] %vm212, %v210
    %216 = vst.msk [vmem:[#allocation5 + $0xc] sm:$0xf] %vm212, %v211
    %v221 = vunpack.c.l.b16 %v208
    %v222 = vunpack.c.l.b16 %v209
    %v223 = vunpack.c.l.b16 %v210
    %v224 = vunpack.c.l.b16 %v211
    %v225 = vpack.c.b16 %v221, %v221
    %v226 = vpack.c.b16 %v222, %v222
    %v227 = vpack.c.b16 %v223, %v223
    %v228 = vpack.c.b16 %v224, %v224
    %229 = vrot.lane.b32.xlu0 %v225, 120
    %v230 = vpop.permute.xlu0 %229
    %231 = vrot.lane.b32.xlu0 %v226, 120
    %v232 = vpop.permute.xlu0 %231
    %233 = vrot.lane.b32.xlu0 %v227, 120
    %v234 = vpop.permute.xlu0 %233
    %235 = vrot.lane.b32.xlu0 %v228, 120
    %v236 = vpop.permute.xlu0 %235
    %241 = vst.msk [vmem:[#allocation6] sm:$0xf] %vm212, %v230
    %242 = vst.msk [vmem:[#allocation6 + $0x4] sm:$0xf] %vm212, %v232
    %243 = vst.msk [vmem:[#allocation6 + $0x8] sm:$0xf] %vm212, %v234
    %244 = vst.msk [vmem:[#allocation6 + $0xc] sm:$0xf] %vm212, %v236
    %245 = vrot.lane.b32.xlu0 %v225, 112
    %v246 = vpop.permute.xlu0 %245
    %247 = vrot.lane.b32.xlu0 %v226, 112
    %v248 = vpop.permute.xlu0 %247
    %249 = vrot.lane.b32.xlu0 %v227, 112
    %v250 = vpop.permute.xlu0 %249
    %251 = vrot.lane.b32.xlu0 %v228, 112
    %v252 = vpop.permute.xlu0 %251
    %257 = vst.msk [vmem:[#allocation8] sm:$0xf] %vm212, %v246
    %258 = vst.msk [vmem:[#allocation8 + $0x4] sm:$0xf] %vm212, %v248
    %259 = vst.msk [vmem:[#allocation8 + $0x8] sm:$0xf] %vm212, %v250
    %260 = vst.msk [vmem:[#allocation8 + $0xc] sm:$0xf] %vm212, %v252
    // Predicated region
    $region26: #{tpu_custom_call.1} parent=1 // pred_check
      _
    $region27: #{tpu_custom_call.1} parent=1 // pred_check_branch
      %262 = sbr.rel (0) target = $region29
    $region28: #{tpu_custom_call.1} parent=1 // pred_region
      %s264 = ssub.s32 256, 256
      %265 = vsyncadd [#allocation4], %s264
      %s266 = sshll.u32 [#allocation5], 4
      %s267 = int_to_ptr.vmem [resolvable:$true] %s266
      %272 = dma.vmem_to_hbm [thread:$0]  %s267, 256, %s5, [#allocation4], 64, 64, 4
    $region29: #{tpu_custom_call.1} parent=1 // pred_fallthru
      _
    // Predicated region
    $region30: #{tpu_custom_call.1} parent=1 // pred_check
      _
    $region31: #{tpu_custom_call.1} parent=1 // pred_check_branch
      %274 = sbr.rel (0) target = $region33
    $region32: #{tpu_custom_call.1} parent=1 // pred_region
      %s276 = ssub.s32 256, 256
      %277 = vsyncadd [#allocation7], %s276
      %s278 = sshll.u32 [#allocation6], 4
      %s279 = int_to_ptr.vmem [resolvable:$true] %s278
      %284 = dma.vmem_to_hbm [thread:$0]  %s279, 256, %s6, [#allocation7], 64, 64, 4
    $region33: #{tpu_custom_call.1} parent=1 // pred_fallthru
      _
    // Predicated region
    $region34: #{tpu_custom_call.1} parent=1 // pred_check
      _
    $region35: #{tpu_custom_call.1} parent=1 // pred_check_branch
      %286 = sbr.rel (0) target = $region37
    $region36: #{tpu_custom_call.1} parent=1 // pred_region
      %s288 = ssub.s32 256, 256
      %289 = vsyncadd [#allocation7], %s288
      %s290 = sshll.u32 [#allocation8], 4
      %s291 = int_to_ptr.vmem [resolvable:$true] %s290
      %296 = dma.vmem_to_hbm [thread:$0]  %s291, 256, %s7, [#allocation7], 64, 64, 4
    $region37: #{tpu_custom_call.1} parent=1 // pred_fallthru
      _
    // Predicated region
    $region38: #{tpu_custom_call.1} parent=1 // pred_check
      _
    $region39: #{tpu_custom_call.1} parent=1 // pred_check_branch
      %298 = sbr.rel (0) target = $region41
    $region40: #{tpu_custom_call.1} parent=1 // pred_region
      %s300 = ssub.s32 128, 128
      %301 = vsyncadd [#allocation10], %s300
      %s303 = sshll.u32 [#allocation9], 4
      %s304 = int_to_ptr.vmem [resolvable:$true] %s303
      %306 = dma.vmem_to_hbm [thread:$0]  %s304, 128, %s8, [#allocation10]
    $region41: #{tpu_custom_call.1} parent=1 // pred_fallthru
      _
    // Predicated region
    $region42: #{tpu_custom_call.1} parent=1 // pred_check
      _
    $region43: #{tpu_custom_call.1} parent=1 // pred_check_branch
      %308 = sbr.rel (0) target = $region45
    $region44: #{tpu_custom_call.1} parent=1 // pred_region
      %309 = dma.done [#allocation4], 256
    $region45: #{tpu_custom_call.1} parent=1 // pred_fallthru
      _
    // Predicated region
    $region46: #{tpu_custom_call.1} parent=1 // pred_check
      _
    $region47: #{tpu_custom_call.1} parent=1 // pred_check_branch
      %311 = sbr.rel (0) target = $region49
    $region48: #{tpu_custom_call.1} parent=1 // pred_region
      %312 = dma.done [#allocation7], 256
    $region49: #{tpu_custom_call.1} parent=1 // pred_fallthru
      _
    // Predicated region
    $region50: #{tpu_custom_call.1} parent=1 // pred_check
      _
    $region51: #{tpu_custom_call.1} parent=1 // pred_check_branch
      %314 = sbr.rel (0) target = $region53
    $region52: #{tpu_custom_call.1} parent=1 // pred_region
      %315 = dma.done [#allocation7], 256
    $region53: #{tpu_custom_call.1} parent=1 // pred_fallthru
      _
    // Predicated region
    $region54: #{tpu_custom_call.1} parent=1 // pred_check
      _
    $region55: #{tpu_custom_call.1} parent=1 // pred_check_branch
      %317 = sbr.rel (0) target = $region57
    $region56: #{tpu_custom_call.1} parent=1 // pred_region
      %318 = dma.done [#allocation10], 128
    $region57: #{tpu_custom_call.1} parent=1 // pred_fallthru
      _
    %319 = vsyncpa [#allocation3], 1
    %320 = vsyncpa [#allocation4], 1
    %321 = vsyncpa [#allocation7], 1
    %322 = vsyncpa [#allocation10], 1

</llo_original>
